<compile_context>
chip_gen: v5e
topology: v5e:2x2
jax: 0.10.0
libtpu: 0.0.40
codegen_flags: <defaults>
</compile_context>

<pallas_src>
import functools

import jax
import jax.numpy as jnp
from jax.experimental import pallas as pl
from jax.experimental.pallas import tpu as pltpu


# --------------------------------------------------------------------------- #
# Kernel                                                                      #
# --------------------------------------------------------------------------- #
def _fused_qkv_kernel(x_ref, w_ref, b_ref, o_ref, *, compute_dtype):
    """One (modality, column-tile, row-tile) grid step.

    x_ref : (TM, c)   row tile of modality i, native dtype
    w_ref : (c, TN)   folded per-modality weight W_eff[i][:, col_tile]
    b_ref : (1, TN)   shared qkv bias slice, f32
    o_ref : (TM, TN)
    """
    x = x_ref[...].astype(compute_dtype)              # in-kernel cast (free-ish VPU)
    acc = jnp.dot(x, w_ref[...], preferred_element_type=jnp.float32)
    o_ref[...] = (acc + b_ref[...]).astype(o_ref.dtype)   # lane-dense store


# --------------------------------------------------------------------------- #
# One-time host-side parameter packing                                        #
# --------------------------------------------------------------------------- #
def prepare_params(wqkv, bqkv, wa_q, wb_q, wa_v, wb_v, compute_dtype=jnp.bfloat16):
    """Fold the LoRA into per-modality effective qkv weights (done once).

    wqkv : (3c, c)  nn.Linear(c, 3c).weight        bqkv : (3c,) its bias
    wa_q, wa_v : (M, r, c)  A_*.weight  (Linear(c, r, bias=False))
    wb_q, wb_v : (M, c, r)  B_*.weight  (Linear(r, c, bias=False))
    """
    cdt = jnp.dtype(compute_dtype)
    m, r, c = wa_q.shape
    f32 = jnp.float32
    hi = jax.lax.Precision.HIGHEST                      # one-time fold: keep it exact
    # Delta_q[i] = A_q[i]^T @ B_q[i]^T  (c, c); likewise for V.
    dq = jnp.einsum("mra,mbr->mab", wa_q.astype(f32), wb_q.astype(f32), precision=hi)
    dv = jnp.einsum("mra,mbr->mab", wa_v.astype(f32), wb_v.astype(f32), precision=hi)
    dw = jnp.concatenate([dq, jnp.zeros((m, c, c), f32), dv], axis=-1)   # (M, c, 3c)
    w_eff = (wqkv.T.astype(f32)[None] + dw).astype(cdt)                  # (M, c, 3c)
    # TODO(synk): on v7x, storing w_eff in fp8 (f32 accumulation) would halve
    # weight VMEM/DMA and double MXU throughput if accuracy allows.
    return dict(
        compute_dtype=cdt,
        w_eff=w_eff,
        bias=bqkv.reshape(1, -1).astype(f32),            # (1, 3c), f32 bias add
    )


# --------------------------------------------------------------------------- #
# Tiling helpers                                                              #
# --------------------------------------------------------------------------- #
def _vmem_capacity_bytes():
    try:
        return int(pltpu.get_tpu_info().vmem_capacity_bytes)
    except Exception:
        return 64 * 1024 * 1024          # conservative (v7x-sized) fallback


def _round_up(v, m):
    return ((v + m - 1) // m) * m


def _select_tiles(rows, c, in_isz, w_isz, out_isz, budget):
    """Pick (row_tile TM, out-column tile TN) that fit the VMEM budget.

    Counts: double-buffered x / out blocks, the in-kernel f32 accumulator
    (+ add temporary), the cast temporary of x, and the weight / bias blocks
    (counted double-buffered as a conservative bound in case single-buffering
    via pl.Buffered(1) is unavailable).
    """
    three_c = 3 * c
    # Sublane granularity of the (possibly ragged) row dim: 8 for 4-byte
    # dtypes, 16 for 2-byte, 32 for 1-byte — take the stricter of in/out.
    sub = max(32 // in_isz, 32 // out_isz, 8)
    rows_pad = _round_up(max(rows, 1), sub)

    tm_cands = sorted(
        {t for t in (4096, 2048, 1024, 512, 256, 128, 64, 32, 16, 8)
         if t <= rows_pad and t % sub == 0} | {rows_pad},
        reverse=True)

    # Column tiles: full 3c, or lane-dense (multiple-of-128) divisors of 3c.
    tn_cands = [three_c]
    for s in (3, 6, 12, 24, 48):
        if three_c % s == 0 and (three_c // s) % 128 == 0:
            tn_cands.append(three_c // s)

    best = None
    for tn in tn_cands:                                  # prefer widest columns
        fixed = 2 * (c * tn * w_isz + tn * 4)            # W_eff block + f32 bias
        for tm in tm_cands:                              # prefer tallest rows
            per_tile = tm * (2 * c * in_isz              # x block (double buf)
                             + c * 4                     # in-kernel cast temp
                             + 2 * tn * out_isz          # out block (double buf)
                             + 2 * tn * 4)               # f32 acc + add temp
            if fixed + per_tile <= budget:
                if best is None or tm > best[0]:
                    best = (tm, tn)
                break
        if best is not None and best[0] >= min(512, rows_pad):
            return best                                  # TM >= 512 target hit
    if best is not None:
        return best
    # Nothing fits our estimate — fall back to the smallest tiles and let the
    # compiler's own VMEM accounting decide.
    return (min(tm_cands), min(tn_cands))


def _single_buffered(block_shape, index_map):
    """BlockSpec for blocks that only change with the slow grid axes: one VMEM
    buffer instead of the default two (the second buffer is dead VMEM)."""
    try:
        return pl.BlockSpec(block_shape, index_map, pipeline_mode=pl.Buffered(1))
    except Exception:
        return pl.BlockSpec(block_shape, index_map)      # fallback: default 2x


# --------------------------------------------------------------------------- #
# Wrapper                                                                     #
# --------------------------------------------------------------------------- #
def multimodal_lora(x, params, num_modals, out_dtype=None):
    """x: (bs_m, n, c) with bs_m = num_modals * bs; returns (bs_m, n, 3c)."""
    bs_m, n, c = x.shape
    assert bs_m % num_modals == 0
    rows = (bs_m // num_modals) * n

    cdt = params["compute_dtype"]
    w_eff, bias = params["w_eff"], params["bias"]
    out_dt = jnp.dtype(out_dtype) if out_dtype is not None else x.dtype

    # No wrapper-side cast: x stays in its native dtype (cast happens in-kernel).
    x_m = x.reshape(num_modals, rows, c)

    in_isz = x.dtype.itemsize
    w_isz = w_eff.dtype.itemsize
    out_isz = jnp.dtype(out_dt).itemsize

    # Generation-aware VMEM budget (v5e/v6e: 128 MiB, v7x: 64 MiB per core).
    vmem_cap = _vmem_capacity_bytes()
    budget = min(int(vmem_cap * 0.8), 100 * 1024 * 1024)
    tm, tn = _select_tiles(rows, c, in_isz, w_isz, out_isz, budget)
    n_splits = (3 * c) // tn

    grid = (num_modals, n_splits, pl.cdiv(rows, tm))     # rows innermost:
    # weight/bias blocks stay resident across all row tiles of a modality.
    # Note (v7x megacore): all three axes are "parallel"; the row axis is the
    # large one and is preferred for even sharding across the two TensorCores.

    flops = 2 * num_modals * rows * c * (3 * c)
    bytes_acc = (x_m.size * in_isz * max(1, n_splits)    # x re-read per col tile
                 + num_modals * rows * 3 * c * out_isz
                 + w_eff.size * w_isz + bias.size * 4)

    kernel = functools.partial(_fused_qkv_kernel, compute_dtype=cdt)

    out = pl.pallas_call(
        kernel,
        out_shape=jax.ShapeDtypeStruct((num_modals, rows, 3 * c), out_dt),
        grid=grid,
        in_specs=[
            pl.BlockSpec((None, tm, c), lambda i, nj, j: (i, j, 0)),        # x tile
            _single_buffered((None, c, tn), lambda i, nj, j: (i, 0, nj)),   # W_eff[i]
            _single_buffered((1, tn), lambda i, nj, j: (0, nj)),            # bias
        ],
        out_specs=pl.BlockSpec((None, tm, tn), lambda i, nj, j: (i, j, nj)),
        compiler_params=pltpu.CompilerParams(
            dimension_semantics=("parallel", "parallel", "parallel"),
            vmem_limit_bytes=budget,
        ),
        cost_estimate=pl.CostEstimate(
            flops=int(flops), transcendentals=0, bytes_accessed=int(bytes_acc)),
    )(x_m, w_eff, bias)

    return out.reshape(bs_m, n, 3 * c)


# --------------------------------------------------------------------------- #
# Pure-JAX reference (mirror of the PyTorch forward)                          #
# --------------------------------------------------------------------------- #
def reference(x, wqkv, bqkv, wa_q, wb_q, wa_v, wb_v, num_modals):
    bs_m, n, c = x.shape
    xm = x.reshape(num_modals, bs_m // num_modals, n, c)
    outs = []
    for i in range(num_modals):
        o = xm[i] @ wqkv.T + bqkv
        new_q = (xm[i] @ wa_q[i].T) @ wb_q[i].T
        new_v = (xm[i] @ wa_v[i].T) @ wb_v[i].T
        o = o.at[..., :c].add(new_q)
        o = o.at[..., 2 * c:].add(new_v)
        outs.append(o)
    return jnp.stack(outs).reshape(bs_m, n, 3 * c)


# --------------------------------------------------------------------------- #
# Self-test                                                                   #
# --------------------------------------------------------------------------- #
if __name__ == "__main__":
    num_modals = 4          # [i, d, e, l]
    bs = 2                  # per-modality batch
    n = 8                   # tokens
    c = 32                  # qkv.in_features == dim
    r = 4                   # LoRA rank
    bs_m = num_modals * bs

    key = jax.random.PRNGKey(0)
    kx, kw, kb, k1, k2, k3, k4 = jax.random.split(key, 7)

    x = jax.random.normal(kx, (bs_m, n, c), dtype=jnp.float32)
    wqkv = jax.random.normal(kw, (3 * c, c), dtype=jnp.float32) * 0.05   # Linear(c,3c).weight
    bqkv = jax.random.normal(kb, (3 * c,), dtype=jnp.float32) * 0.05     # Linear(c,3c).bias
    wa_q = jax.random.normal(k1, (num_modals, r, c), dtype=jnp.float32) * 0.05
    wb_q = jax.random.normal(k2, (num_modals, c, r), dtype=jnp.float32) * 0.05
    wa_v = jax.random.normal(k3, (num_modals, r, c), dtype=jnp.float32) * 0.05
    wb_v = jax.random.normal(k4, (num_modals, c, r), dtype=jnp.float32) * 0.05

    ref = reference(x, wqkv, bqkv, wa_q, wb_q, wa_v, wb_v, num_modals)

    # 1) f32 compute path (folded weights kept in f32, f32 output).
    #    Note: default TPU matmul precision is bf16-pass based; for very large
    #    c, pass precision=HIGHEST in-kernel for tighter agreement.
    params_f32 = prepare_params(wqkv, bqkv, wa_q, wb_q, wa_v, wb_v,
                                compute_dtype=jnp.float32)
    out_f32 = jax.block_until_ready(multimodal_lora(x, params_f32, num_modals))
    assert out_f32.shape == (bs_m, n, 3 * c), out_f32.shape
    assert jnp.allclose(out_f32, ref, atol=5e-3, rtol=5e-3), "f32 mismatch vs reference"

    # 2) Default path: bf16 MXU inputs + f32 accumulation, f32 output.
    params_bf16 = prepare_params(wqkv, bqkv, wa_q, wb_q, wa_v, wb_v)
    out_bf16 = jax.block_until_ready(multimodal_lora(x, params_bf16, num_modals))
    assert out_bf16.shape == (bs_m, n, 3 * c), out_bf16.shape
    assert jnp.allclose(out_bf16, ref, atol=5e-2, rtol=5e-2), "bf16 mismatch vs reference"

    # 3) bf16 output (halves the dominant HBM stream, v6e win).
    out_bf16o = jax.block_until_ready(
        multimodal_lora(x, params_bf16, num_modals, out_dtype=jnp.bfloat16))
    assert out_bf16o.dtype == jnp.bfloat16
    assert jnp.allclose(out_bf16o.astype(jnp.float32), ref, atol=5e-2, rtol=5e-2), \
        "bf16-out mismatch vs reference"

    print("KERNEL_OK")
</pallas_src>

<mosaic_0001>
module attributes {stable_mosaic.version = 11 : i64} {
  func.func @_fused_qkv_kernel(%arg0: i32, %arg1: i32, %arg2: i32, %arg3: memref<1x16x32xf32, #tpu.memory_space<vmem>>, %arg4: memref<1x32x96xf32, #tpu.memory_space<vmem>>, %arg5: memref<1x96xf32, #tpu.memory_space<vmem>>, %arg6: memref<1x16x96xf32, #tpu.memory_space<vmem>>) attributes {dimension_semantics = [#tpu.dimension_semantics<parallel>, #tpu.dimension_semantics<parallel>, #tpu.dimension_semantics<parallel>], iteration_bounds = array<i64: 4, 1, 1>, scalar_prefetch = 0 : i64, scratch_operands = 0 : i64, tpu.core_type = #tpu.core_type<tc>, window_params = [{transform_indices = @transform_0, window_bounds = array<i64: 1, 16, 32>}, {pipeline_mode = #tpu.pipeline_mode<synchronous>, transform_indices = @transform_1, window_bounds = array<i64: 1, 32, 96>}, {pipeline_mode = #tpu.pipeline_mode<synchronous>, transform_indices = @transform_2, window_bounds = array<i64: 1, 96>}, {transform_indices = @transform_3, window_bounds = array<i64: 1, 16, 96>}]} {
    %c0 = arith.constant 0 : index
    %c0_0 = arith.constant 0 : index
    %c0_1 = arith.constant 0 : index
    %0 = vector.load %arg3[%c0, %c0_0, %c0_1] : memref<1x16x32xf32, #tpu.memory_space<vmem>>, vector<1x16x32xf32>
    %1 = vector.shape_cast %0 : vector<1x16x32xf32> to vector<16x32xf32>
    %c0_2 = arith.constant 0 : index
    %c0_3 = arith.constant 0 : index
    %c0_4 = arith.constant 0 : index
    %2 = vector.load %arg4[%c0_2, %c0_3, %c0_4] : memref<1x32x96xf32, #tpu.memory_space<vmem>>, vector<1x32x96xf32>
    %3 = vector.shape_cast %2 : vector<1x32x96xf32> to vector<32x96xf32>
    %cst = arith.constant dense<0.000000e+00> : vector<16x96xf32>
    %4 = tpu.matmul %1, %3, %cst {dimension_numbers = #tpu.dot_dimension_numbers<[1], [0], [0], [1], [0, 0, 1, 1], [], []>} : vector<16x32xf32>, vector<32x96xf32>, vector<16x96xf32> -> vector<16x96xf32>
    %c0_5 = arith.constant 0 : index
    %c0_6 = arith.constant 0 : index
    %5 = vector.load %arg5[%c0_5, %c0_6] : memref<1x96xf32, #tpu.memory_space<vmem>>, vector<1x96xf32>
    %6 = vector.broadcast %5 : vector<1x96xf32> to vector<16x96xf32>
    %7 = arith.addf %4, %6 : vector<16x96xf32>
    %c0_7 = arith.constant 0 : index
    %c0_8 = arith.constant 0 : index
    %c0_9 = arith.constant 0 : index
    %8 = vector.load %arg6[%c0_7, %c0_8, %c0_9] : memref<1x16x96xf32, #tpu.memory_space<vmem>>, vector<1x16x96xf32>
    %9 = vector.shape_cast %8 : vector<1x16x96xf32> to vector<16x96xf32>
    %10 = vector.shape_cast %7 : vector<16x96xf32> to vector<1x16x96xf32>
    tpu.vector_store %arg6[%c0_7, %c0_8, %c0_9], %10 {strides = array<i32>} : memref<1x16x96xf32, #tpu.memory_space<vmem>>, vector<1x16x96xf32>,
    return
  }
  func.func @transform_0(%arg0: i32, %arg1: i32, %arg2: i32) -> (i32, i32, i32) {
    %c0_i32 = arith.constant 0 : i32
    %c0_i32_0 = arith.constant 0 : i32
    return %arg0, %arg2, %c0_i32 : i32, i32, i32
  }
  func.func @transform_1(%arg0: i32, %arg1: i32, %arg2: i32) -> (i32, i32, i32) {
    %c0_i32 = arith.constant 0 : i32
    %c0_i32_0 = arith.constant 0 : i32
    return %arg0, %c0_i32, %arg1 : i32, i32, i32
  }
  func.func @transform_2(%arg0: i32, %arg1: i32, %arg2: i32) -> (i32, i32) {
    %c0_i32 = arith.constant 0 : i32
    %c0_i32_0 = arith.constant 0 : i32
    return %c0_i32, %arg1 : i32, i32
  }
  func.func @transform_3(%arg0: i32, %arg1: i32, %arg2: i32) -> (i32, i32, i32) {
    %c0_i32 = arith.constant 0 : i32
    return %arg0, %arg2, %arg1 : i32, i32, i32
  }
}

</mosaic_0001>

<llo_original>
// kernel: tpu_custom_call.1
$region0: #{tpu_custom_call.1}
  #allocation0 [shape = 'u32[]', space=smem, size = 0x4, offset = 0x4, fixed_abs, tag = 'smem constant byte address 0x4 - core index']
  #allocation1 [shape = 'u32[72,128]{1,0:T(1,128)}', space=vmem, size = 0x9000, scoped, tag = 'internal scratch']
  %s0 = inlined_call_operand.hbm [shape: f32[4,16,32], index: 0, kind: input, shape index: {}]
  %s1 = inlined_call_operand.hbm [shape: f32[4,32,96], index: 1, kind: input, shape index: {}]
  %s2 = inlined_call_operand.vmem [shape: f32[1,96], index: 2, kind: input, shape index: {}]
  %s3 = inlined_call_operand.hbm [shape: f32[4,16,96], index: 3, kind: output, shape index: {}]
  %s4 = sld [smem:[#allocation0]]
  $region53: #{tpu_custom_call.1} parent=0
    _
  %s6 = ssub.s32 1, %s4
  %s7 = scalar_select 0, %s6, %s4
  $region1: #{tpu_custom_call.1} parent=0
    #allocation2 [shape = 'u8[16384]{0}', space=vmem, size = 0x4000, scoped, tag = 'input window, operand 0']
    #allocation3 [shape = 's32[2]{0}', space=sflag, size = 0x8, scoped, tag = 'scoped memory for tpu_custom_call.1']
    #allocation4 [shape = 's32[2]{0}', space=sflag, size = 0x8, scoped, tag = 'scoped memory for tpu_custom_call.1']
    #allocation5 [shape = 'u8[16384]{0}', space=vmem, size = 0x4000, scoped, tag = 'input window, operand 1, single buffered']
    #allocation6 [shape = 's32[1]{0}', space=sflag, size = 0x4, scoped, tag = 'scoped memory for tpu_custom_call.1']
    #allocation7 [shape = 'u8[16384]{0}', space=vmem, size = 0x4000, scoped, tag = 'output window, operand 0']
    %8 = vsyncpa [#allocation3], 0
    %s9 = scalar_lea.sflag [#allocation3], 1
    %10 = vsyncpa %s9, 0
    %11 = vsyncpa [#allocation6], 0
    %12 = vsyncpa [#allocation4], 0
    %s13 = scalar_lea.sflag [#allocation4], 1
    %14 = vsyncpa %s13, 0
    loop: start=0, step=1, limit=6
    $region2: #{tpu_custom_call.1} parent=1 // loop_pre_header
      _
    $region3: #{tpu_custom_call.1} parent=1 // loop_header
      %s16 = sphi 0, %s20
      %p17 = scmp.ge.s32.totalorder %s16, 6
      %s23 = sphi 0, %s42
      %s24 = sphi 0, %s38
      %s25 = sphi 0, %s34
      %s26 = sphi 0, %s23
      %s27 = sphi 0, %s24
      %s28 = sphi 0, %s25
      %s29 = sphi 0, %s26
      %s30 = sphi 0, %s27
      %s31 = sphi 0, %s28
      %s47 = sphi 0, %s49
      %s50 = sphi 0, %s47
      %s51 = sphi 0, %s50
      %s67 = sphi 0, %s51
      %s75 = sphi 0, %s77
      %s78 = sphi 0, %s75
      %s79 = sphi 0, %s78
      %s95 = sphi 0, %s79
      %s101 = sphi 0, %s103
      %s104 = sphi 0, %s101
      %s105 = sphi 0, %s104
      %s121 = sphi 0, %s105
      %s131 = sphi 0, %s133
      %s134 = sphi 0, %s131
      %s135 = sphi 0, %s134
      %s151 = sphi 0, %s135
    $region4: #{tpu_custom_call.1} parent=1 // loop_header_branch
      %19 = sbr.rel (%p17) target = $region8
    $region5: #{tpu_custom_call.1} parent=1 // loop_body
      %s21 = ssub.s32 %s16, 1
      %s22 = ssub.s32 %s16, 2
      %s32 = sadd.s32 1, %s25
      %p33 = scmp.ge.s32.totalorder %s32, 1
      %s34 = scalar_select %p33, 0, %s32
      %s35 = sadd.s32 1, %s24
      %s36 = scalar_select %p33, %s35, %s24
      %p37 = scmp.ge.s32.totalorder %s36, 1
      %s38 = scalar_select %p37, 0, %s36
      %s39 = sadd.s32 1, %s23
      %s40 = scalar_select %p37, %s39, %s23
      %p41 = scmp.ge.s32.totalorder %s40, 4
      %s42 = scalar_select %p41, 0, %s40
      %s43 = ssub.s32 %s23, %s42
      %s44 = ssub.s32 %s25, %s34
      %s45 = sor.u32 %s43, %s44
      %p46 = scmp.eq.s32.totalorder %s45, 0
      %s48 = sadd.s32 %s47, 1
      %s49 = scalar_select %p46, %s47, %s48
      %p52 = pneg %p46
      %p53 = scmp.eq.s32.totalorder %s16, 3
      %p54 = por %p52, %p53
      %p55 = scmp.ne.s32.totalorder %s47, %s50
      %p56 = scmp.eq.s32.totalorder %s16, 0
      %p57 = por %p55, %p56
      %p58 = scmp.ne.s32.totalorder %s47, %s50
      %p59 = scmp.eq.s32.totalorder %s21, 3
      %p60 = por %p58, %p59
      %p61 = scmp.ne.s32.totalorder %s50, %s51
      %p62 = scmp.eq.s32.totalorder %s21, 0
      %p63 = por %p61, %p62
      %p64 = scmp.ne.s32.totalorder %s50, %s51
      %p65 = scmp.eq.s32.totalorder %s22, 3
      %p66 = por %p64, %p65
      %p68 = scmp.ne.s32.totalorder %s51, %s67
      %p69 = scmp.eq.s32.totalorder %s22, 0
      %p70 = por %p68, %p69
      %s71 = ssub.s32 %s23, %s42
      %s72 = ssub.s32 %s24, %s38
      %s73 = sor.u32 %s71, %s72
      %p74 = scmp.eq.s32.totalorder %s73, 0
      %s76 = sadd.s32 %s75, 1
      %s77 = scalar_select %p74, %s75, %s76
      %p80 = pneg %p74
      %p81 = scmp.eq.s32.totalorder %s16, 3
      %p82 = por %p80, %p81
      %p83 = scmp.ne.s32.totalorder %s75, %s78
      %p84 = scmp.eq.s32.totalorder %s16, 0
      %p85 = por %p83, %p84
      %p86 = scmp.ne.s32.totalorder %s75, %s78
      %p87 = scmp.eq.s32.totalorder %s21, 3
      %p88 = por %p86, %p87
      %p89 = scmp.ne.s32.totalorder %s78, %s79
      %p90 = scmp.eq.s32.totalorder %s21, 0
      %p91 = por %p89, %p90
      %p92 = scmp.ne.s32.totalorder %s78, %s79
      %p93 = scmp.eq.s32.totalorder %s22, 3
      %p94 = por %p92, %p93
      %p96 = scmp.ne.s32.totalorder %s79, %s95
      %p97 = scmp.eq.s32.totalorder %s22, 0
      %p98 = por %p96, %p97
      %s99 = ssub.s32 %s24, %s38
      %p100 = scmp.eq.s32.totalorder %s99, 0
      %s102 = sadd.s32 %s101, 1
      %s103 = scalar_select %p100, %s101, %s102
      %p106 = pneg %p100
      %p107 = scmp.eq.s32.totalorder %s16, 3
      %p108 = por %p106, %p107
      %p109 = scmp.ne.s32.totalorder %s101, %s104
      %p110 = scmp.eq.s32.totalorder %s16, 0
      %p111 = por %p109, %p110
      %p112 = scmp.ne.s32.totalorder %s101, %s104
      %p113 = scmp.eq.s32.totalorder %s21, 3
      %p114 = por %p112, %p113
      %p115 = scmp.ne.s32.totalorder %s104, %s105
      %p116 = scmp.eq.s32.totalorder %s21, 0
      %p117 = por %p115, %p116
      %p118 = scmp.ne.s32.totalorder %s104, %s105
      %p119 = scmp.eq.s32.totalorder %s22, 3
      %p120 = por %p118, %p119
      %p122 = scmp.ne.s32.totalorder %s105, %s121
      %p123 = scmp.eq.s32.totalorder %s22, 0
      %p124 = por %p122, %p123
      %s125 = ssub.s32 %s23, %s42
      %s126 = ssub.s32 %s25, %s34
      %s127 = sor.u32 %s125, %s126
      %s128 = ssub.s32 %s24, %s38
      %s129 = sor.u32 %s127, %s128
      %p130 = scmp.eq.s32.totalorder %s129, 0
      %s132 = sadd.s32 %s131, 1
      %s133 = scalar_select %p130, %s131, %s132
      %p136 = pneg %p130
      %p137 = scmp.eq.s32.totalorder %s16, 3
      %p138 = por %p136, %p137
      %p139 = scmp.ne.s32.totalorder %s131, %s134
      %p140 = scmp.eq.s32.totalorder %s16, 0
      %p141 = por %p139, %p140
      %p142 = scmp.ne.s32.totalorder %s131, %s134
      %p143 = scmp.eq.s32.totalorder %s21, 3
      %p144 = por %p142, %p143
      %p145 = scmp.ne.s32.totalorder %s134, %s135
      %p146 = scmp.eq.s32.totalorder %s21, 0
      %p147 = por %p145, %p146
      %p148 = scmp.ne.s32.totalorder %s134, %s135
      %p149 = scmp.eq.s32.totalorder %s22, 3
      %p150 = por %p148, %p149
      %p152 = scmp.ne.s32.totalorder %s135, %s151
      %p153 = scmp.eq.s32.totalorder %s22, 0
      %p154 = por %p152, %p153
      %p155 = scmp.le.s32.totalorder 1, %s16
      %p156 = scmp.lt.s32.totalorder %s16, 5
      %p157 = pnand %p155, %p156
      %p158 = pneg %p157
      // Predicated region
      $region9: #{tpu_custom_call.1} parent=5 // pred_check
        _
      $region10: #{tpu_custom_call.1} parent=5 // pred_check_branch
        %160 = sbr.rel (%p157) target = $region12
      $region11: #{tpu_custom_call.1} parent=5 // pred_region
        %s161 = ssub.s32 %s16, 1
        // Predicated region
        $region13: #{tpu_custom_call.1} parent=11 // pred_check
          %p162 = pneg %p91
        $region14: #{tpu_custom_call.1} parent=11 // pred_check_branch
          %164 = sbr.rel (%p162) target = $region16
        $region15: #{tpu_custom_call.1} parent=11 // pred_region
          %166 = vsyncadd [#allocation6], 0
          %s167 = smul.addr %s26, 4
          %s168 = sadd.s32 %s27, %s167
          %s169 = smul.addr %s168, 8
          %s170 = scalar_lea.hbm %s1, %s169
          %s171 = sshll.u32 %s170, 4
          %s172 = int_to_ptr.hbm [resolvable:$true] %s171
          %s173 = sshll.u32 [#allocation5], 4
          %s174 = int_to_ptr.vmem [resolvable:$true] %s173
          %179 = dma.hbm_to_vmem [thread:$0]  %s172, 512, %s174, [#allocation6], 128, 128, 8
        $region16: #{tpu_custom_call.1} parent=11 // pred_fallthru
          _
        // Predicated region
        $region17: #{tpu_custom_call.1} parent=11 // pred_check
          %p180 = pneg %p117
        $region18: #{tpu_custom_call.1} parent=11 // pred_check_branch
          %182 = sbr.rel (%p180) target = $region20
        $region19: #{tpu_custom_call.1} parent=11 // pred_region
          %p183 = scmp.lt.s32.totalorder %s27, 0
          %s184 = scalar_select %p183, %s27, 0
          %s185 = scalar_lea.vmem %s2, %s184
        $region20: #{tpu_custom_call.1} parent=11 // pred_fallthru
          _
      $region12: #{tpu_custom_call.1} parent=5 // pred_fallthru
        _
      %p186 = scmp.lt.s32.totalorder %s16, 4
      // Predicated region
      $region21: #{tpu_custom_call.1} parent=5 // pred_check
        %p187 = pneg %p186
      $region22: #{tpu_custom_call.1} parent=5 // pred_check_branch
        %189 = sbr.rel (%p187) target = $region24
      $region23: #{tpu_custom_call.1} parent=5 // pred_region
        // Predicated region
        $region25: #{tpu_custom_call.1} parent=23 // pred_check
          %p190 = pneg %p57
        $region26: #{tpu_custom_call.1} parent=23 // pred_check_branch
          %192 = sbr.rel (%p190) target = $region28
        $region27: #{tpu_custom_call.1} parent=23 // pred_region
          %s193 = sand.u32 %s47, 1
          %s194 = scalar_lea.sflag [#allocation3], %s193
          %s195 = sand.u32 %s47, 1
          %s196 = smul.addr %s195, 16
          %s197 = scalar_lea.vmem [#allocation2], %s196
          %s198 = smul.u32 2, %s25
          %200 = vsyncadd %s194, 0
          %s201 = smul.addr %s23, 2
          %s202 = sadd.s32 %s198, %s201
          %s203 = smul.addr %s202, 8
          %s204 = scalar_lea.hbm %s0, %s203
          %s205 = sshll.u32 %s204, 4
          %s206 = int_to_ptr.hbm [resolvable:$true] %s205
          %s207 = sshll.u32 %s197, 4
          %s208 = int_to_ptr.vmem [resolvable:$true] %s207
          %213 = dma.hbm_to_vmem [thread:$0]  %s206, 256, %s208, %s194, 128, 128, 8
        $region28: #{tpu_custom_call.1} parent=23 // pred_fallthru
          _
      $region24: #{tpu_custom_call.1} parent=5 // pred_fallthru
        _
      %p214 = scmp.le.s32.totalorder 1, %s16
      %p215 = scmp.lt.s32.totalorder %s16, 5
      %p216 = pnand %p214, %p215
      %p217 = pneg %p216
      // Predicated region
      $region29: #{tpu_custom_call.1} parent=5 // pred_check
        _
      $region30: #{tpu_custom_call.1} parent=5 // pred_check_branch
        %219 = sbr.rel (%p216) target = $region32
      $region31: #{tpu_custom_call.1} parent=5 // pred_region
        %s220 = ssub.s32 %s16, 1
        %s221 = sand.u32 %s50, 1
        %s222 = scalar_lea.sflag [#allocation3], %s221
        %s223 = sand.u32 %s50, 1
        %s224 = smul.addr %s223, 16
        %s225 = scalar_lea.vmem [#allocation2], %s224
        // Predicated region
        $region33: #{tpu_custom_call.1} parent=31 // pred_check
          %p226 = pneg %p63
        $region34: #{tpu_custom_call.1} parent=31 // pred_check_branch
          %228 = sbr.rel (%p226) target = $region36
        $region35: #{tpu_custom_call.1} parent=31 // pred_region
          %230 = dma.done %s222, 256
        $region36: #{tpu_custom_call.1} parent=31 // pred_fallthru
          _
        // Predicated region
        $region37: #{tpu_custom_call.1} parent=31 // pred_check
          %p231 = pneg %p91
        $region38: #{tpu_custom_call.1} parent=31 // pred_check_branch
          %233 = sbr.rel (%p231) target = $region40
        $region39: #{tpu_custom_call.1} parent=31 // pred_region
          %235 = dma.done [#allocation6], 512
        $region40: #{tpu_custom_call.1} parent=31 // pred_fallthru
          _
        %s236 = sand.u32 %s50, 1
        %s237 = scalar_lea.sflag [#allocation3], %s236
        %s238 = sand.u32 %s50, 1
        %s239 = smul.addr %s238, 16
        %s240 = scalar_lea.vmem [#allocation2], %s239
        %p241 = pneg %p63
        %p242 = pneg %p60
        %p243 = pneg %p91
        %p244 = pneg %p88
        %p245 = scmp.lt.s32.totalorder %s27, 0
        %s246 = scalar_select %p245, %s27, 0
        %s247 = scalar_lea.vmem %s2, %s246
        %p248 = pneg %p117
        %p249 = pneg %p114
        %p250 = pneg %p147
        %p251 = pneg %p144
        %s252 = sand.u32 %s134, 1
        %s253 = scalar_lea.sflag [#allocation4], %s252
        %s254 = sand.u32 %s134, 1
        %s255 = smul.addr %s254, 16
        %s256 = scalar_lea.vmem [#allocation7], %s255
        %s257 = smul.u32 2, %s28
        %p258 = scmp.lt.s32.totalorder %s27, 0
        %s259 = scalar_select %p258, %s27, 0
        %s260 = scalar_lea.vmem %s2, %s259
        %s261 = smul.u32 2, %s28
        %v262 = vld [vmem:[%s225] sm:$0xff]
        %v263 = vld [vmem:[%s225 + $0x8] sm:$0xff]
        %v264 = vld [vmem:[#allocation5] sm:$0xff]
        %v265 = vld [vmem:[#allocation5 + $0x8] sm:$0xff]
        %v266 = vld [vmem:[#allocation5 + $0x10] sm:$0xff]
        %v267 = vld [vmem:[#allocation5 + $0x18] sm:$0xff]
        %v268 = vld [vmem:[%s260] sm:$0x1]
        %v270 = vperm.slane %v268, 0
        %vm272 = vcmask 261120
        %v274 = vsel %vm272, %v262, 0
        %v277 = vsel %vm272, %v263, 0
        %279 = vmatpush.msra.mxu0 0.0
        %280 = vmatpush.msra.mxu0 0.0
        %281 = vmatpush.msra.mxu0 0.0
        %282 = vmatpush.msra.mxu0 0.0
        %283 = vmatpush.msra.mxu0 0.0
        %284 = vmatpush.msra.mxu0 0.0
        %285 = vmatpush.msra.mxu0 0.0
        %286 = vmatpush.msra.mxu0 0.0
        %287 = vmatpush.msra.mxu0 0.0
        %288 = vmatpush.msra.mxu0 0.0
        %289 = vmatpush.msra.mxu0 0.0
        %290 = vmatpush.msra.mxu0 0.0
        %291 = vmatpush.msra.mxu0 %v267
        %292 = vmatpush.msra.mxu0 %v266
        %293 = vmatpush.msra.mxu0 %v265
        %294 = vmatpush.msra.mxu0 %v264
        %295 = vmatmul.f32.gmra.mxu0 %v274
        %v296 = vpop.f32.mrf.mxu0
        %v297 = vadd.f32 %v270, %v296
        %298 = vmatmul.f32.gmra.mxu0 %v277
        %v299 = vpop.f32.mrf.mxu0
        %v300 = vadd.f32 %v270, %v299
        %301 = vdwg.mxu0
        %vm302 = vcmask 785408
        %303 = vst.msk [vmem:[%s256] sm:$0xff] %vm302, %v297
        %304 = vst.msk [vmem:[%s256 + $0x8] sm:$0xff] %vm302, %v300
        %s305 = sand.u32 %s134, 1
        %s306 = scalar_lea.sflag [#allocation4], %s305
        %s307 = sand.u32 %s134, 1
        %s308 = smul.addr %s307, 16
        %s309 = scalar_lea.vmem [#allocation7], %s308
        // Predicated region
        $region41: #{tpu_custom_call.1} parent=31 // pred_check
          %p310 = pneg %p144
        $region42: #{tpu_custom_call.1} parent=31 // pred_check_branch
          %312 = sbr.rel (%p310) target = $region44
        $region43: #{tpu_custom_call.1} parent=31 // pred_region
          %s313 = smul.u32 2, %s28
          %315 = vsyncadd %s306, 0
          %s316 = sadd.s32 %s27, %s313
          %s317 = smul.addr %s26, 2
          %s318 = sadd.s32 %s316, %s317
          %s319 = smul.addr %s318, 8
          %s320 = scalar_lea.hbm %s3, %s319
          %s321 = sshll.u32 %s309, 4
          %s322 = int_to_ptr.vmem [resolvable:$true] %s321
          %s323 = sshll.u32 %s320, 4
          %s324 = int_to_ptr.hbm [resolvable:$true] %s323
          %329 = dma.vmem_to_hbm [thread:$0]  %s322, 256, %s324, %s306, 128, 128, 8
        $region44: #{tpu_custom_call.1} parent=31 // pred_fallthru
          _
      $region32: #{tpu_custom_call.1} parent=5 // pred_fallthru
        _
      %p330 = scmp.le.s32.totalorder 2, %s16
      // Predicated region
      $region45: #{tpu_custom_call.1} parent=5 // pred_check
        %p331 = pneg %p330
      $region46: #{tpu_custom_call.1} parent=5 // pred_check_branch
        %333 = sbr.rel (%p331) target = $region48
      $region47: #{tpu_custom_call.1} parent=5 // pred_region
        %s334 = ssub.s32 %s16, 2
        // Predicated region
        $region49: #{tpu_custom_call.1} parent=47 // pred_check
          %p335 = pneg %p150
        $region50: #{tpu_custom_call.1} parent=47 // pred_check_branch
          %337 = sbr.rel (%p335) target = $region52
        $region51: #{tpu_custom_call.1} parent=47 // pred_region
          %s338 = sand.u32 %s135, 1
          %s339 = scalar_lea.sflag [#allocation4], %s338
          %s340 = sand.u32 %s135, 1
          %s341 = smul.addr %s340, 16
          %s342 = scalar_lea.vmem [#allocation7], %s341
          %344 = dma.done %s339, 256
        $region52: #{tpu_custom_call.1} parent=47 // pred_fallthru
          _
      $region48: #{tpu_custom_call.1} parent=5 // pred_fallthru
        _
    $region6: #{tpu_custom_call.1} parent=1 // loop_footer
      %s20 = sadd.s32 1, %s16
    $region7: #{tpu_custom_call.1} parent=1 // loop_footer_branch
      %15 = sbr.rel target = $region3
    $region8: #{tpu_custom_call.1} parent=1 // loop_exit
      _
    %345 = vsyncpa [#allocation3], 1
    %s346 = scalar_lea.sflag [#allocation3], 1
    %347 = vsyncpa %s346, 1
    %348 = vsyncpa [#allocation6], 1
    %349 = vsyncpa [#allocation4], 1
    %s350 = scalar_lea.sflag [#allocation4], 1
    %351 = vsyncpa %s350, 1

</llo_original>
